<compile_context>
chip_gen: v7x
topology: tpu7x:2x2x1
jax: 0.10.0
libtpu: 0.0.40
codegen_flags: <defaults>
</compile_context>

<pallas_src>
import functools

import jax
import jax.numpy as jnp
from jax.experimental import pallas as pl
from jax.experimental.pallas import tpu as pltpu

LN_EPS = 1e-5  # PyTorch nn.LayerNorm default


# ----------------------------------------------------------------------------
# VMEM budget (generation-aware: ~128 MiB on v5e/v6e, 64 MiB per TC on v7x)
# ----------------------------------------------------------------------------
def _query_vmem_budget():
    try:
        info = pltpu.get_tpu_info()
        cap = int(getattr(info, "vmem_capacity_bytes", 64 << 20))
    except Exception:
        cap = 64 << 20  # safe on every generation
    # leave ~20% headroom for Mosaic internal scratch / semaphores
    return max(16 << 20, int(cap * 0.8))


_VMEM_BUDGET = _query_vmem_budget()


# ----------------------------------------------------------------------------
# Kernels
# ----------------------------------------------------------------------------
def _sublayer_kernel_resident(x_ref, w_ref, b_ref, o_ref):
    """Single column tile: the folded bf16 W is fully resident in VMEM.

    x_ref: (tm, D) residual-stream row tile
    w_ref: (D, D)  bf16 folded weight (LN gamma already folded in)
    b_ref: (1, D)  f32 folded bias    (beta @ W + b)
    """
    x = x_ref[...].astype(jnp.float32)

    # LayerNorm over the last dim (biased variance, like torch.nn.LayerNorm).
    mean = jnp.mean(x, axis=-1, keepdims=True)
    centered = x - mean
    var = jnp.mean(centered * centered, axis=-1, keepdims=True)
    normed = centered * jax.lax.rsqrt(var + LN_EPS)

    # Sublayer: dense projection on the MXU in bf16, f32 accumulation.
    sub = jnp.dot(normed.astype(jnp.bfloat16), w_ref[...],
                  preferred_element_type=jnp.float32) + b_ref[...]

    # Dropout is identity at inference time (p=0.1 only active in training).
    # TODO(synk): training-mode dropout would use pltpu.prng_seed/prng_random_bits.

    # Residual connection (f32 add, cast at the store).
    o_ref[...] = (x + sub).astype(o_ref.dtype)


def _sublayer_kernel_coltiled(xfull_ref, xcols_ref, w_ref, b_ref, o_ref, normed_ref):
    """Column-tiled W for large D; LayerNorm computed once per row tile.

    xfull_ref: (tm, D)  full-width row tile (only read when the column index is 0)
    xcols_ref: (tm, tn) residual columns for this output tile
    w_ref:     (D, tn)  bf16 folded weight column tile
    b_ref:     (1, tn)  f32 folded bias column tile
    o_ref:     (tm, tn) output tile
    normed_ref:(tm, D)  bf16 scratch caching LayerNorm(x) across the column axis
    """
    @pl.when(pl.program_id(1) == 0)
    def _():
        x = xfull_ref[...].astype(jnp.float32)
        mean = jnp.mean(x, axis=-1, keepdims=True)
        centered = x - mean
        var = jnp.mean(centered * centered, axis=-1, keepdims=True)
        normed_ref[...] = (centered * jax.lax.rsqrt(var + LN_EPS)).astype(jnp.bfloat16)

    sub = jnp.dot(normed_ref[...], w_ref[...],
                  preferred_element_type=jnp.float32) + b_ref[...]
    o_ref[...] = (xcols_ref[...].astype(jnp.float32) + sub).astype(o_ref.dtype)


# ----------------------------------------------------------------------------
# Tiling helpers
# ----------------------------------------------------------------------------
def _round_up(v, m):
    return ((v + m - 1) // m) * m


def _col_tile_candidates(d):
    """Multiples of 128 that divide d, descending (capped at 2048)."""
    n = d // 128
    cands = [k * 128 for k in range(n, 0, -1) if n % k == 0]
    return [c for c in cands if c <= 2048] or [128]


def _vmem_need(tm, tn, d, x_bytes, out_bytes):
    """Estimated VMEM bytes for a (tm, tn) tiling (tn == d -> resident-W path)."""
    n = 2 * tm * d * x_bytes        # x row tile (double-buffered)
    n += 2 * d * tn * 2             # bf16 folded W tile (double-buffered)
    n += 2 * tn * 4                 # folded bias
    n += 2 * tm * tn * out_bytes    # output tile
    if tn != d:
        n += 2 * tm * tn * x_bytes  # x column tile for the residual add
        n += tm * d * 2             # cached bf16 LayerNorm scratch
    return n


def _pick_tiles(rows, d, x_bytes, out_bytes, budget, tm_target, row_pack):
    """Return (tm, tn): row tile and W-column tile (tn == d => W fully resident)."""
    tm_cap = max(row_pack,
                 min(_round_up(rows, row_pack), _round_up(tm_target, row_pack)))

    # Preferred: keep the whole folded W resident (constant index map -> one DMA).
    tm = tm_cap
    while tm > row_pack and _vmem_need(tm, d, d, x_bytes, out_bytes) > budget:
        tm -= row_pack
    if _vmem_need(tm, d, d, x_bytes, out_bytes) <= budget:
        return tm, d

    # Otherwise tile W along its output columns (needed once D reaches a few
    # thousand, especially on v7x's 64 MiB VMEM). Prefer the biggest row tile.
    best = None
    for tn in _col_tile_candidates(d):
        tm = tm_cap
        while tm > row_pack and _vmem_need(tm, tn, d, x_bytes, out_bytes) > budget:
            tm -= row_pack
        if _vmem_need(tm, tn, d, x_bytes, out_bytes) <= budget and (
                best is None or tm > best[0]):
            best = (tm, tn)
            if tm == tm_cap:
                break
    return best if best is not None else (row_pack, 128)


# ----------------------------------------------------------------------------
# Parameter folding (call ONCE at parameter-setup time, not per step)
# ----------------------------------------------------------------------------
def fold_sublayer_params(gamma, beta, w, b):
    """Fold the LN affine into the dense sublayer (exact algebraic rewrite):
         (n * gamma + beta) @ W + b  ==  n @ (diag(gamma) W) + (beta @ W + b)
    The folded W is stored in bf16 (the matmul runs bf16 on the MXU)."""
    w_f32 = w.astype(jnp.float32)
    d = w_f32.shape[0]
    w_folded = (gamma.astype(jnp.float32)[:, None] * w_f32).astype(jnp.bfloat16)
    b_folded = (beta.astype(jnp.float32) @ w_f32 + b.astype(jnp.float32)).reshape(1, d)
    return w_folded, b_folded


# ----------------------------------------------------------------------------
# Wrapper
# ----------------------------------------------------------------------------
@functools.partial(jax.jit, static_argnames=("tm_target", "tiling_budget"))
def sublayer_connection(x, w_folded, b_folded, *, tm_target=None, tiling_budget=None):
    """x: (..., D). Returns x + Linear_folded(LayerNorm(x)), same shape/dtype as x."""
    orig_shape = x.shape
    D = orig_shape[-1]
    assert D % 128 == 0, "d_k must be a multiple of 128 for lane-dense tiles"
    assert w_folded.shape == (D, D) and b_folded.shape == (1, D)

    budget = int(tiling_budget) if tiling_budget is not None else _VMEM_BUDGET
    if tm_target is None:
        # 128 MiB-VMEM parts (v5e/v6e) afford bigger row tiles than v7x (64 MiB).
        tm_target = 1024 if budget >= (80 << 20) else 512

    x2 = x.reshape(-1, D)
    rows = x2.shape[0]
    x_bytes = x2.dtype.itemsize
    out_bytes = x_bytes
    row_pack = 8 * max(1, 4 // x_bytes)  # sublane packing: f32 -> 8, bf16 -> 16

    tm, tn = _pick_tiles(rows, D, x_bytes, out_bytes, budget, tm_target, row_pack)

    # Pad rows up to a multiple of tm so the tile size never collapses for
    # awkward row counts; padded (all-zero) rows are LayerNorm-safe (var=0
    # -> normed=0) and sliced away below.
    rows_p = _round_up(rows, tm)
    if rows_p != rows:
        x2 = jnp.pad(x2, ((0, rows_p - rows), (0, 0)))

    n_row_tiles = rows_p // tm
    n_col_tiles = D // tn

    vmem_limit = int(max(16 << 20, _vmem_need(tm, tn, D, x_bytes, out_bytes) + (2 << 20)))

    cost = pl.CostEstimate(
        flops=2 * rows_p * D * D,
        transcendentals=rows_p,  # one rsqrt per row
        bytes_accessed=rows_p * D * (x_bytes + out_bytes) + D * D * 2 + D * 4
        + (rows_p * D * x_bytes if n_col_tiles > 1 else 0),
    )

    if n_col_tiles == 1:
        kernel = _sublayer_kernel_resident
        grid = (n_row_tiles,)
        in_specs = [
            pl.BlockSpec((tm, D), lambda i: (i, 0)),   # x row tile
            pl.BlockSpec((D, D), lambda i: (0, 0)),    # folded W (bf16, resident)
            pl.BlockSpec((1, D), lambda i: (0, 0)),    # folded bias (broadcast)
        ]
        out_specs = pl.BlockSpec((tm, D), lambda i: (i, 0))
        scratch = []
        operands = (x2, w_folded, b_folded)
        semantics = ("parallel",)
    else:
        kernel = _sublayer_kernel_coltiled
        grid = (n_row_tiles, n_col_tiles)
        in_specs = [
            pl.BlockSpec((tm, D), lambda i, j: (i, 0)),    # full row (LN, fetched once per i)
            pl.BlockSpec((tm, tn), lambda i, j: (i, j)),   # residual columns
            pl.BlockSpec((D, tn), lambda i, j: (0, j)),    # W column tile (bf16)
            pl.BlockSpec((1, tn), lambda i, j: (0, j)),    # bias column tile
        ]
        out_specs = pl.BlockSpec((tm, tn), lambda i, j: (i, j))
        scratch = [pltpu.VMEM((tm, D), jnp.bfloat16)]      # cached LayerNorm(x)
        operands = (x2, x2, w_folded, b_folded)
        semantics = ("parallel", "arbitrary")

    out2 = pl.pallas_call(
        kernel,
        out_shape=jax.ShapeDtypeStruct((rows_p, D), x.dtype),
        grid_spec=pltpu.PrefetchScalarGridSpec(
            num_scalar_prefetch=0,
            grid=grid,
            in_specs=in_specs,
            out_specs=out_specs,
            scratch_shapes=scratch,
        ),
        compiler_params=pltpu.CompilerParams(
            dimension_semantics=semantics,
            vmem_limit_bytes=vmem_limit,
        ),
        cost_estimate=cost,
    )(*operands)

    if rows_p != rows:
        out2 = out2[:rows]
    return out2.reshape(orig_shape)


# ----------------------------------------------------------------------------
# Pure-JAX reference (torch semantics: LayerNorm -> Linear -> residual), f32
# ----------------------------------------------------------------------------
def reference(x, gamma, beta, w, b):
    xf = x.astype(jnp.float32)
    mean = jnp.mean(xf, axis=-1, keepdims=True)
    var = jnp.mean(jnp.square(xf - mean), axis=-1, keepdims=True)
    normed = (xf - mean) / jnp.sqrt(var + LN_EPS) * gamma + beta
    sub = normed @ w.astype(jnp.float32) + b
    return xf + sub


if __name__ == "__main__":
    def make_params(key, d):
        kg, kb, kw, kbias = jax.random.split(key, 4)
        gamma = 1.0 + 0.1 * jax.random.normal(kg, (d,), dtype=jnp.float32)
        beta = 0.1 * jax.random.normal(kb, (d,), dtype=jnp.float32)
        w = jax.random.normal(kw, (d, d), dtype=jnp.float32) * (1.0 / jnp.sqrt(d))
        b = 0.01 * jax.random.normal(kbias, (d,), dtype=jnp.float32)
        return gamma, beta, w, b

    # --- 1) module-scale shape (B, S, d_k) = (2, 8, 128), f32, resident-W path ---
    key = jax.random.PRNGKey(0)
    kx, kw, kb, kg, kbe = jax.random.split(key, 5)
    B, S, D = 2, 8, 128
    x = jax.random.normal(kx, (B, S, D), dtype=jnp.float32)
    gamma = 1.0 + 0.1 * jax.random.normal(kg, (D,), dtype=jnp.float32)
    beta = 0.1 * jax.random.normal(kbe, (D,), dtype=jnp.float32)
    w = jax.random.normal(kw, (D, D), dtype=jnp.float32) * (1.0 / jnp.sqrt(D))
    b = jax.random.normal(kb, (D,), dtype=jnp.float32) * 0.01

    wf, bf = fold_sublayer_params(gamma, beta, w, b)
    out = jax.block_until_ready(sublayer_connection(x, wf, bf))
    ref = reference(x, gamma, beta, w, b)
    assert out.shape == x.shape and out.dtype == x.dtype
    err1 = float(jnp.max(jnp.abs(out.astype(jnp.float32) - ref)))
    assert jnp.allclose(out.astype(jnp.float32), ref, atol=2e-2, rtol=2e-2), \
        f"test1 mismatch vs reference: {err1}"

    # --- 2) ragged row count + bf16 activations (row padding, bf16 I/O path) ---
    k2x, k2p = jax.random.split(jax.random.PRNGKey(1))
    B2, S2, D2 = 2, 7, 256  # rows = 14: not a multiple of the sublane packing
    gamma2, beta2, w2, b2 = make_params(k2p, D2)
    x2 = jax.random.normal(k2x, (B2, S2, D2), dtype=jnp.bfloat16)
    wf2, bf2 = fold_sublayer_params(gamma2, beta2, w2, b2)
    out2 = jax.block_until_ready(sublayer_connection(x2, wf2, bf2))
    ref2 = reference(x2, gamma2, beta2, w2, b2)
    assert out2.shape == x2.shape and out2.dtype == x2.dtype
    err2 = float(jnp.max(jnp.abs(out2.astype(jnp.float32) - ref2)))
    assert jnp.allclose(out2.astype(jnp.float32), ref2, atol=2e-1, rtol=1e-1), \
        f"test2 mismatch vs reference: {err2}"

    # --- 3) force the column-tiled (large-D) path at a small shape via a tiny
    #        tiling budget, to exercise the W-column tiling + LN scratch path ---
    k3x, k3p = jax.random.split(jax.random.PRNGKey(2))
    B3, S3, D3 = 2, 16, 256
    gamma3, beta3, w3, b3 = make_params(k3p, D3)
    x3 = jax.random.normal(k3x, (B3, S3, D3), dtype=jnp.float32)
    wf3, bf3 = fold_sublayer_params(gamma3, beta3, w3, b3)
    out3 = jax.block_until_ready(
        sublayer_connection(x3, wf3, bf3, tiling_budget=200 * 1024))
    ref3 = reference(x3, gamma3, beta3, w3, b3)
    err3 = float(jnp.max(jnp.abs(out3.astype(jnp.float32) - ref3)))
    assert jnp.allclose(out3.astype(jnp.float32), ref3, atol=5e-2, rtol=5e-2), \
        f"test3 mismatch vs reference: {err3}"

    print("KERNEL_OK")
</pallas_src>

<mosaic_0001>
module attributes {stable_mosaic.version = 11 : i64} {
  func.func @_sublayer_kernel_resident(%arg0: i32, %arg1: memref<16x128xf32, #tpu.memory_space<vmem>>, %arg2: memref<128x128xbf16, #tpu.memory_space<vmem>>, %arg3: memref<1x128xf32, #tpu.memory_space<vmem>>, %arg4: memref<16x128xf32, #tpu.memory_space<vmem>>) attributes {dimension_semantics = [#tpu.dimension_semantics<parallel>], iteration_bounds = array<i64: 1>, scalar_prefetch = 0 : i64, scratch_operands = 0 : i64, tpu.core_type = #tpu.core_type<tc>, window_params = [{transform_indices = @transform_0, window_bounds = array<i64: 16, 128>}, {pipeline_mode = #tpu.pipeline_mode<synchronous>, transform_indices = @transform_1, window_bounds = array<i64: 128, 128>}, {pipeline_mode = #tpu.pipeline_mode<synchronous>, transform_indices = @transform_2, window_bounds = array<i64: 1, 128>}, {transform_indices = @transform_3, window_bounds = array<i64: 16, 128>}]} {
    %c0 = arith.constant 0 : index
    %c0_0 = arith.constant 0 : index
    %0 = vector.load %arg1[%c0, %c0_0] : memref<16x128xf32, #tpu.memory_space<vmem>>, vector<16x128xf32>
    %cst = arith.constant dense<0.000000e+00> : vector<16xf32>
    %1 = vector.multi_reduction <add>, %0, %cst [1] : vector<16x128xf32> to vector<16xf32>
    %2 = vector.shape_cast %1 : vector<16xf32> to vector<16x1xf32>
    %cst_1 = arith.constant 1.280000e+02 : f32
    %3 = vector.broadcast %cst_1 : f32 to vector<16x1xf32>
    %4 = arith.divf %2, %3 : vector<16x1xf32>
    %5 = vector.broadcast %4 : vector<16x1xf32> to vector<16x128xf32>
    %6 = arith.subf %0, %5 : vector<16x128xf32>
    %7 = arith.mulf %6, %6 : vector<16x128xf32>
    %cst_2 = arith.constant dense<0.000000e+00> : vector<16xf32>
    %8 = vector.multi_reduction <add>, %7, %cst_2 [1] : vector<16x128xf32> to vector<16xf32>
    %9 = vector.shape_cast %8 : vector<16xf32> to vector<16x1xf32>
    %cst_3 = arith.constant 1.280000e+02 : f32
    %10 = vector.broadcast %cst_3 : f32 to vector<16x1xf32>
    %11 = arith.divf %9, %10 : vector<16x1xf32>
    %cst_4 = arith.constant 9.99999974E-6 : f32
    %12 = vector.broadcast %cst_4 : f32 to vector<16x1xf32>
    %13 = arith.addf %11, %12 : vector<16x1xf32>
    %14 = math.rsqrt %13 : vector<16x1xf32>
    %15 = vector.broadcast %14 : vector<16x1xf32> to vector<16x128xf32>
    %16 = arith.mulf %6, %15 : vector<16x128xf32>
    %17 = arith.truncf %16 : vector<16x128xf32> to vector<16x128xbf16>
    %c0_5 = arith.constant 0 : index
    %c0_6 = arith.constant 0 : index
    %18 = vector.load %arg2[%c0_5, %c0_6] : memref<128x128xbf16, #tpu.memory_space<vmem>>, vector<128x128xbf16>
    %cst_7 = arith.constant dense<0.000000e+00> : vector<16x128xf32>
    %19 = tpu.matmul %17, %18, %cst_7 {dimension_numbers = #tpu.dot_dimension_numbers<[1], [0], [0], [1], [0, 0, 1, 1], [], []>} : vector<16x128xbf16>, vector<128x128xbf16>, vector<16x128xf32> -> vector<16x128xf32>
    %c0_8 = arith.constant 0 : index
    %c0_9 = arith.constant 0 : index
    %20 = vector.load %arg3[%c0_8, %c0_9] : memref<1x128xf32, #tpu.memory_space<vmem>>, vector<1x128xf32>
    %21 = vector.broadcast %20 : vector<1x128xf32> to vector<16x128xf32>
    %22 = arith.addf %19, %21 : vector<16x128xf32>
    %23 = arith.addf %0, %22 : vector<16x128xf32>
    %c0_10 = arith.constant 0 : index
    %c0_11 = arith.constant 0 : index
    %24 = vector.load %arg4[%c0_10, %c0_11] : memref<16x128xf32, #tpu.memory_space<vmem>>, vector<16x128xf32>
    tpu.vector_store %arg4[%c0_10, %c0_11], %23 {strides = array<i32>} : memref<16x128xf32, #tpu.memory_space<vmem>>, vector<16x128xf32>,
    return
  }
  func.func @transform_0(%arg0: i32) -> (i32, i32) {
    %c0_i32 = arith.constant 0 : i32
    %c0_i32_0 = arith.constant 0 : i32
    return %arg0, %c0_i32 : i32, i32
  }
  func.func @transform_1(%arg0: i32) -> (i32, i32) {
    %c0_i32 = arith.constant 0 : i32
    %c0_i32_0 = arith.constant 0 : i32
    %c0_i32_1 = arith.constant 0 : i32
    return %c0_i32, %c0_i32_0 : i32, i32
  }
  func.func @transform_2(%arg0: i32) -> (i32, i32) {
    %c0_i32 = arith.constant 0 : i32
    %c0_i32_0 = arith.constant 0 : i32
    %c0_i32_1 = arith.constant 0 : i32
    return %c0_i32, %c0_i32_0 : i32, i32
  }
  func.func @transform_3(%arg0: i32) -> (i32, i32) {
    %c0_i32 = arith.constant 0 : i32
    %c0_i32_0 = arith.constant 0 : i32
    return %arg0, %c0_i32 : i32, i32
  }
}

</mosaic_0001>

<llo_original>
// kernel: sublayer_connection.1
$region0: #{sublayer_connection.1}
  #allocation0 [shape = 'u32[]', space=smem, size = 0x4, offset = 0x4, fixed_abs, tag = 'smem constant byte address 0x4 - core index']
  #allocation1 [shape = 'u32[144,128]{1,0:T(1,128)}', space=vmem, size = 0x12000, scoped, tag = 'internal scratch']
  %s0 = inlined_call_operand.hbm [shape: f32[16,128], index: 0, kind: input, shape index: {}]
  %s1 = inlined_call_operand.hbm [shape: bf16[128,128], index: 1, kind: input, shape index: {}]
  %s2 = inlined_call_operand.vmem [shape: f32[1,128], index: 2, kind: input, shape index: {}]
  %s3 = inlined_call_operand.hbm [shape: f32[16,128], index: 3, kind: output, shape index: {}]
  %s4 = sld [smem:[#allocation0]]
  $region30: #{sublayer_connection.1} parent=0
    _
  %s6 = ssub.s32 1, %s4
  %s7 = scalar_select 0, %s6, %s4
  $region1: #{sublayer_connection.1} parent=0
    #allocation2 [shape = 'u8[8192]{0}', space=vmem, size = 0x2000, scoped, tag = 'input window, operand 0, single buffered']
    #allocation3 [shape = 's32[1]{0}', space=sflag, size = 0x4, scoped, tag = 'scoped memory for sublayer_connection.1']
    #allocation4 [shape = 's32[1]{0}', space=sflag, size = 0x4, scoped, tag = 'scoped memory for sublayer_connection.1']
    #allocation5 [shape = 'u8[32768]{0}', space=vmem, size = 0x8000, scoped, tag = 'input window, operand 1, single buffered']
    #allocation6 [shape = 's32[1]{0}', space=sflag, size = 0x4, scoped, tag = 'scoped memory for sublayer_connection.1']
    #allocation7 [shape = 'u8[8192]{0}', space=vmem, size = 0x2000, scoped, tag = 'output window, operand 0, single buffered']
    %8 = vsyncpa [#allocation3], 0
    %9 = vsyncpa [#allocation6], 0
    %10 = vsyncpa [#allocation4], 0
    // Predicated region
    $region2: #{sublayer_connection.1} parent=1 // pred_check
      _
    $region3: #{sublayer_connection.1} parent=1 // pred_check_branch
      %12 = sbr.rel (0) target = $region5
    $region4: #{sublayer_connection.1} parent=1 // pred_region
      %s14 = ssub.s32 256, 256
      %15 = vsyncadd [#allocation3], %s14
      %s16 = sshll.u32 [#allocation2], 4
      %s17 = int_to_ptr.vmem [resolvable:$true] %s16
      %22 = dma.hbm_to_vmem [thread:$0]  %s0, 256, %s17, [#allocation3], 128, 128, 8
    $region5: #{sublayer_connection.1} parent=1 // pred_fallthru
      _
    // Predicated region
    $region6: #{sublayer_connection.1} parent=1 // pred_check
      _
    $region7: #{sublayer_connection.1} parent=1 // pred_check_branch
      %24 = sbr.rel (0) target = $region9
    $region8: #{sublayer_connection.1} parent=1 // pred_region
      %s26 = ssub.s32 1024, 1024
      %27 = vsyncadd [#allocation6], %s26
      %s28 = sshll.u32 [#allocation5], 4
      %s29 = int_to_ptr.vmem [resolvable:$true] %s28
      %34 = dma.hbm_to_vmem [thread:$0]  %s1, 1024, %s29, [#allocation6], 64, 64, 4
    $region9: #{sublayer_connection.1} parent=1 // pred_fallthru
      _
    // Predicated region
    $region10: #{sublayer_connection.1} parent=1 // pred_check
      _
    $region11: #{sublayer_connection.1} parent=1 // pred_check_branch
      %36 = sbr.rel (0) target = $region13
    $region12: #{sublayer_connection.1} parent=1 // pred_region
      _
    $region13: #{sublayer_connection.1} parent=1 // pred_fallthru
      _
    // Predicated region
    $region14: #{sublayer_connection.1} parent=1 // pred_check
      _
    $region15: #{sublayer_connection.1} parent=1 // pred_check_branch
      %38 = sbr.rel (0) target = $region17
    $region16: #{sublayer_connection.1} parent=1 // pred_region
      %39 = dma.done [#allocation3], 256
    $region17: #{sublayer_connection.1} parent=1 // pred_fallthru
      _
    // Predicated region
    $region18: #{sublayer_connection.1} parent=1 // pred_check
      _
    $region19: #{sublayer_connection.1} parent=1 // pred_check_branch
      %41 = sbr.rel (0) target = $region21
    $region20: #{sublayer_connection.1} parent=1 // pred_region
      %42 = dma.done [#allocation6], 1024
    $region21: #{sublayer_connection.1} parent=1 // pred_fallthru
      _
    %v44 = vld [vmem:[#allocation2] sm:$0xff]
    %v45 = vld [vmem:[#allocation2 + $0x8] sm:$0xff]
    %46 = vadd.xlane.f32.xlu0 %v44
    %v47 = vpop.xlane.xlu0 %46
    %48 = vadd.xlane.f32.xlu0 %v45
    %v49 = vpop.xlane.xlu0 %48
    %v50 = vrcp.pop 128.0
    %v51 = vmul.f32 %v47, %v50
    %v52 = vmul.f32 %v49, %v50
    %v53 = vsub.f32 %v44, %v51
    %v54 = vsub.f32 %v45, %v52
    %v55 = vmul.f32 %v53, %v53
    %v56 = vmul.f32 %v54, %v54
    %57 = vadd.xlane.f32.xlu0 %v55
    %v58 = vpop.xlane.xlu0 %57
    %59 = vadd.xlane.f32.xlu0 %v56
    %v60 = vpop.xlane.xlu0 %59
    %v61 = vmul.f32 %v58, %v50
    %v62 = vmul.f32 %v60, %v50
    %v63 = vadd.f32 %v61, 1e-05
    %v64 = vadd.f32 %v62, 1e-05
    %v65 = vrsqrt.pop %v63
    %v66 = vrsqrt.pop %v64
    %v67 = vmul.f32 %v53, %v65
    %v68 = vmul.f32 %v54, %v66
    %v69 = vpack.c.bf16 %v68, %v67
    %v70 = vld [vmem:[#allocation5] sm:$0xf]
    %v71 = vld [vmem:[#allocation5 + $0x4] sm:$0xf]
    %v72 = vld [vmem:[#allocation5 + $0x8] sm:$0xf]
    %v73 = vld [vmem:[#allocation5 + $0xc] sm:$0xf]
    %v74 = vld [vmem:[#allocation5 + $0x10] sm:$0xf]
    %v75 = vld [vmem:[#allocation5 + $0x14] sm:$0xf]
    %v76 = vld [vmem:[#allocation5 + $0x18] sm:$0xf]
    %v77 = vld [vmem:[#allocation5 + $0x1c] sm:$0xf]
    %v78 = vld [vmem:[#allocation5 + $0x20] sm:$0xf]
    %v79 = vld [vmem:[#allocation5 + $0x24] sm:$0xf]
    %v80 = vld [vmem:[#allocation5 + $0x28] sm:$0xf]
    %v81 = vld [vmem:[#allocation5 + $0x2c] sm:$0xf]
    %v82 = vld [vmem:[#allocation5 + $0x30] sm:$0xf]
    %v83 = vld [vmem:[#allocation5 + $0x34] sm:$0xf]
    %v84 = vld [vmem:[#allocation5 + $0x38] sm:$0xf]
    %v85 = vld [vmem:[#allocation5 + $0x3c] sm:$0xf]
    %v86 = vld [vmem:[%s2] sm:$0x1]
    %v88 = vlaneseq
    %v89 = vshrl.u32 %v88, 7
    %v90 = vsub.s32 0, %v89
    %v91 = vrot.slane %v86, %v90
    %v109 = vunpack.c.l.b16 %v70
    %v110 = vunpack.c.l.b16 %v71
    %v111 = vunpack.c.l.b16 %v72
    %v112 = vunpack.c.l.b16 %v73
    %v113 = vunpack.c.l.b16 %v74
    %v114 = vunpack.c.l.b16 %v75
    %v115 = vunpack.c.l.b16 %v76
    %v116 = vunpack.c.l.b16 %v77
    %v117 = vunpack.c.l.b16 %v78
    %v118 = vunpack.c.l.b16 %v79
    %v119 = vunpack.c.l.b16 %v80
    %v120 = vunpack.c.l.b16 %v81
    %v121 = vunpack.c.l.b16 %v82
    %v122 = vunpack.c.l.b16 %v83
    %v123 = vunpack.c.l.b16 %v84
    %v124 = vunpack.c.l.b16 %v85
    %v125 = vpack.c.b16 %v110, %v109
    %v126 = vpack.c.b16 %v112, %v111
    %v127 = vpack.c.b16 %v114, %v113
    %v128 = vpack.c.b16 %v116, %v115
    %v129 = vpack.c.b16 %v118, %v117
    %v130 = vpack.c.b16 %v120, %v119
    %v131 = vpack.c.b16 %v122, %v121
    %v132 = vpack.c.b16 %v124, %v123
    %141 = vmatprep.subr.bf16.mxu0 0
    %142 = vmatpush1.bf16.msra.mxu0 %v125
    %143 = vmatprep.subr.bf16.mxu0 0
    %144 = vmatpush1.bf16.msra.mxu0 %v126
    %145 = vmatprep.subr.bf16.mxu0 0
    %146 = vmatpush1.bf16.msra.mxu0 %v127
    %147 = vmatprep.subr.bf16.mxu0 0
    %148 = vmatpush1.bf16.msra.mxu0 %v128
    %149 = vmatprep.subr.bf16.mxu0 0
    %150 = vmatpush1.bf16.msra.mxu0 %v129
    %151 = vmatprep.subr.bf16.mxu0 0
    %152 = vmatpush1.bf16.msra.mxu0 %v130
    %153 = vmatprep.subr.bf16.mxu0 0
    %154 = vmatpush1.bf16.msra.mxu0 %v131
    %155 = vmatprep.subr.bf16.mxu0 0
    %156 = vmatpush1.bf16.msra.mxu0 %v132
    %157 = vmatprep.subr.bf16.mxu0 0
    %158 = vmatpush1.bf16.msra.mxu0 0
    %159 = vmatprep.subr.bf16.mxu0 0
    %160 = vmatpush1.bf16.msra.mxu0 0
    %161 = vmatprep.subr.bf16.mxu0 0
    %162 = vmatpush1.bf16.msra.mxu0 0
    %163 = vmatprep.subr.bf16.mxu0 0
    %164 = vmatpush1.bf16.msra.mxu0 0
    %165 = vmatprep.subr.bf16.mxu0 0
    %166 = vmatpush1.bf16.msra.mxu0 0
    %167 = vmatprep.subr.bf16.mxu0 0
    %168 = vmatpush1.bf16.msra.mxu0 0
    %169 = vmatprep.subr.bf16.mxu0 0
    %170 = vmatpush1.bf16.msra.mxu0 0
    %171 = vmatprep.subr.bf16.mxu0 0
    %172 = vmatpush1.bf16.msra.mxu0 0
    %173 = vmatprep.mubr.bf16.mxu0 0
    %174 = vmatmul.mubr.bf16.gmra.mrb[0].mxu0 %v69
    %v175 = vpop.f32.mrb[0].mxu0
    %v176 = vadd.f32 %v91, %v175
    %v177 = vpop.f32.mrb[0].mxu0
    %v178 = vpop.f32.mrb[0].mxu0
    %v179 = vadd.f32 %v91, %v178
    %v180 = vpop.f32.mrb[0].mxu0
    %181 = vdwg.mxu0
    %v182 = vadd.f32 %v44, %v176
    %v183 = vadd.f32 %v45, %v179
    %184 = vst [vmem:[#allocation7] sm:$0xff] %v182
    %185 = vst [vmem:[#allocation7 + $0x8] sm:$0xff] %v183
    // Predicated region
    $region22: #{sublayer_connection.1} parent=1 // pred_check
      _
    $region23: #{sublayer_connection.1} parent=1 // pred_check_branch
      %187 = sbr.rel (0) target = $region25
    $region24: #{sublayer_connection.1} parent=1 // pred_region
      %s189 = ssub.s32 256, 256
      %190 = vsyncadd [#allocation4], %s189
      %s191 = sshll.u32 [#allocation7], 4
      %s192 = int_to_ptr.vmem [resolvable:$true] %s191
      %197 = dma.vmem_to_hbm [thread:$0]  %s192, 256, %s3, [#allocation4], 128, 128, 8
    $region25: #{sublayer_connection.1} parent=1 // pred_fallthru
      _
    // Predicated region
    $region26: #{sublayer_connection.1} parent=1 // pred_check
      _
    $region27: #{sublayer_connection.1} parent=1 // pred_check_branch
      %199 = sbr.rel (0) target = $region29
    $region28: #{sublayer_connection.1} parent=1 // pred_region
      %200 = dma.done [#allocation4], 256
    $region29: #{sublayer_connection.1} parent=1 // pred_fallthru
      _
    %201 = vsyncpa [#allocation3], 1
    %202 = vsyncpa [#allocation6], 1
    %203 = vsyncpa [#allocation4], 1

</llo_original>
